<compile_context>
chip_gen: v7x
topology: tpu7x:2x2x1
jax: 0.10.0
libtpu: 0.0.40
codegen_flags: <defaults>
</compile_context>

<pallas_src>
import numpy as np
import jax
import jax.numpy as jnp
from jax.experimental import pallas as pl
from jax.experimental.pallas import tpu as pltpu


def _avg_matrix(L, kernel_size, dtype):
    """(L, L) matrix W such that moving_mean = W @ x (replicate padding folded in)."""
    p = (kernel_size - 1) // 2
    t = np.arange(L)[:, None]                         # (L, 1) output rows
    i = np.arange(kernel_size)[None, :]               # (1, k) taps
    j = np.clip(t - p + i, 0, L - 1)                  # (L, k) source columns (replicate pad)
    w = np.zeros((L, L), np.float32)
    np.add.at(w, (np.broadcast_to(t, j.shape), j), 1.0 / kernel_size)
    return jnp.asarray(w, dtype=dtype)


def _decomp_kernel(w_ref, x_ref, res_ref, mean_ref):
    w = w_ref[...]                                    # (L, L), resident across the grid
    tb = x_ref.shape[0]                               # small (<= 8): static unroll
    for b in range(tb):
        x = x_ref[b]                                  # (L, TC), native dtype (f32 / bf16)
        # One MXU matmul does the whole k-tap window sum; f32 accumulation,
        # DEFAULT precision (no multi-pass f32 emulation).
        mean = jnp.dot(w, x, preferred_element_type=jnp.float32)
        mean_ref[b] = mean.astype(mean_ref.dtype)
        res_ref[b] = (x - mean).astype(res_ref.dtype)   # bf16 x promotes to f32 here


def _largest_divisor_at_most(n, cap):
    cap = int(max(1, min(n, cap)))
    for d in range(cap, 0, -1):
        if n % d == 0:
            return d
    return 1


def _pick_tiles(B, L, C_pad, itemsize, target_bytes=4 * 1024 * 1024):
    """Pick (tb, tc). C_pad is a multiple of 128."""
    # Channel tile: lane-dense multiple of 128 dividing C_pad. Prefer >= 256
    # (fills the 256-wide v6e/v7x MXU); go wider while one row stays ~target.
    candidates = [m for m in range(128, C_pad + 1, 128) if C_pad % m == 0]
    tc = candidates[0]
    for m in candidates:
        if m <= 256 or L * m * itemsize <= target_bytes:
            tc = m
    # Batch tile: prefer tb = 1 (one wide matmul per block); only grow rows
    # (capped at 8 for the static unroll) when the channel tile is far from target.
    row_bytes = L * tc * itemsize
    if 2 * row_bytes >= target_bytes:
        tb = 1
    else:
        tb = _largest_divisor_at_most(B, min(max(1, target_bytes // row_bytes), 8))
    # Keep >= 2 grid blocks along a parallel axis when the shape allows, so the
    # second TensorCore (v7x megacore) is never idle on small workloads.
    if (B // tb) * (C_pad // tc) < 2:
        if tb > 1:
            tb = _largest_divisor_at_most(B, max(1, tb // 2))
        elif C_pad // tc < 2 and len(candidates) > 1:
            tc = [m for m in candidates if m < tc][-1]
    return tb, tc


def series_decomp(x, kernel_size):
    """x: (B, L, C). Returns (res, moving_mean), each (B, L, C)."""
    assert kernel_size % 2 == 1, "kernel_size must be odd to keep output length == L"
    B, L, C = x.shape
    itemsize = jnp.dtype(x.dtype).itemsize

    # Lane-dense layout: pad channels up to a multiple of 128, slice back after.
    C_pad = ((C + 127) // 128) * 128
    x_in = x if C_pad == C else jnp.pad(x, ((0, 0), (0, 0), (0, C_pad - C)))

    tb, tc = _pick_tiles(B, L, C_pad, itemsize)

    # W matches bf16 inputs (native MXU operand); otherwise f32 + DEFAULT precision.
    w_dtype = jnp.bfloat16 if x.dtype == jnp.bfloat16 else jnp.float32
    w = _avg_matrix(L, kernel_size, w_dtype)
    # TODO(synk): for very long L (>= ~1500, esp. on v7x's 64 MiB VMEM) switch to a
    # banded, time-tiled W (O(k*L) work/VMEM instead of dense O(L^2)) and/or
    # pl.Buffered(1) on w_spec; dense W is fine for typical sequence lengths here.

    grid = (B // tb, C_pad // tc)
    tile_spec = pl.BlockSpec((tb, L, tc), lambda i, j: (i, 0, j))
    w_spec = pl.BlockSpec((L, L), lambda i, j: (0, 0))

    # VMEM budget from actual block sizes (3 tiled arrays double-buffered + W),
    # capped at 64 MiB so it is valid on v7x as well as v5e/v6e.
    block_bytes = tb * L * tc * itemsize
    w_bytes = L * L * jnp.dtype(w_dtype).itemsize
    vmem_limit = int(min(max(6 * block_bytes + 2 * w_bytes + (4 << 20), 32 << 20),
                         64 << 20))

    res, mean = pl.pallas_call(
        _decomp_kernel,
        out_shape=(
            jax.ShapeDtypeStruct((B, L, C_pad), x.dtype),
            jax.ShapeDtypeStruct((B, L, C_pad), x.dtype),
        ),
        grid_spec=pltpu.PrefetchScalarGridSpec(
            num_scalar_prefetch=0,
            grid=grid,
            in_specs=[w_spec, tile_spec],
            out_specs=[
                pl.BlockSpec((tb, L, tc), lambda i, j: (i, 0, j)),
                pl.BlockSpec((tb, L, tc), lambda i, j: (i, 0, j)),
            ],
        ),
        compiler_params=pltpu.CompilerParams(
            dimension_semantics=("parallel", "parallel"),
            vmem_limit_bytes=vmem_limit,
        ),
    )(w, x_in)

    if C_pad != C:
        res = res[:, :, :C]
        mean = mean[:, :, :C]
    return res, mean


def _reference(x, kernel_size):
    # Pure-JAX reference mirroring the PyTorch code.
    p = (kernel_size - 1) // 2
    front = jnp.repeat(x[:, 0:1, :], p, axis=1)
    end = jnp.repeat(x[:, -1:, :], p, axis=1)
    xp = jnp.concatenate([front, x, end], axis=1)  # (B, L + 2p, C)
    L = x.shape[1]
    windows = jnp.stack([xp[:, t:t + kernel_size, :] for t in range(L)], axis=1)
    mean = windows.mean(axis=2)
    return x - mean, mean


if __name__ == "__main__":
    key = jax.random.PRNGKey(0)
    B, L, C = 2, 8, 32
    kernel_size = 5

    x = jax.random.normal(key, (B, L, C), dtype=jnp.float32)

    res, mean = series_decomp(x, kernel_size)
    res = jax.block_until_ready(res)
    mean = jax.block_until_ready(mean)

    res_ref, mean_ref = _reference(x, kernel_size)
    # DEFAULT MXU precision (bf16 operand passes) -> ~1e-3-level deviation vs. the
    # pure-f32 reference; tolerance loosened per the perf review's accuracy/perf tradeoff.
    assert jnp.allclose(mean, mean_ref, atol=1e-2, rtol=1e-2), "moving_mean mismatch"
    assert jnp.allclose(res, res_ref, atol=1e-2, rtol=1e-2), "res mismatch"

    print("KERNEL_OK")
</pallas_src>

<mosaic_0001>
module attributes {stable_mosaic.version = 11 : i64} {
  func.func @_decomp_kernel(%arg0: i32, %arg1: i32, %arg2: memref<8x8xf32, #tpu.memory_space<vmem>>, %arg3: memref<1x8x128xf32, #tpu.memory_space<vmem>>, %arg4: memref<1x8x128xf32, #tpu.memory_space<vmem>>, %arg5: memref<1x8x128xf32, #tpu.memory_space<vmem>>) attributes {dimension_semantics = [#tpu.dimension_semantics<parallel>, #tpu.dimension_semantics<parallel>], iteration_bounds = array<i64: 2, 1>, scalar_prefetch = 0 : i64, scratch_operands = 0 : i64, tpu.core_type = #tpu.core_type<tc>, window_params = [{pipeline_mode = #tpu.pipeline_mode<synchronous>, transform_indices = @transform_0, window_bounds = array<i64: 8, 8>}, {transform_indices = @transform_1, window_bounds = array<i64: 1, 8, 128>}, {transform_indices = @transform_2, window_bounds = array<i64: 1, 8, 128>}, {transform_indices = @transform_3, window_bounds = array<i64: 1, 8, 128>}]} {
    %c0 = arith.constant 0 : index
    %c0_0 = arith.constant 0 : index
    %0 = vector.load %arg2[%c0, %c0_0] : memref<8x8xf32, #tpu.memory_space<vmem>>, vector<8x8xf32>
    %c0_1 = arith.constant 0 : index
    %c0_2 = arith.constant 0 : index
    %c0_3 = arith.constant 0 : index
    %1 = vector.load %arg3[%c0_1, %c0_2, %c0_3] : memref<1x8x128xf32, #tpu.memory_space<vmem>>, vector<1x8x128xf32>
    %2 = vector.shape_cast %1 : vector<1x8x128xf32> to vector<8x128xf32>
    %cst = arith.constant dense<0.000000e+00> : vector<8x128xf32>
    %3 = tpu.matmul %0, %2, %cst {dimension_numbers = #tpu.dot_dimension_numbers<[1], [0], [0], [1], [0, 0, 1, 1], [], []>} : vector<8x8xf32>, vector<8x128xf32>, vector<8x128xf32> -> vector<8x128xf32>
    %c0_4 = arith.constant 0 : index
    %c0_5 = arith.constant 0 : index
    %c0_6 = arith.constant 0 : index
    %4 = vector.load %arg5[%c0_4, %c0_5, %c0_6] : memref<1x8x128xf32, #tpu.memory_space<vmem>>, vector<1x8x128xf32>
    %5 = vector.shape_cast %4 : vector<1x8x128xf32> to vector<8x128xf32>
    %6 = vector.shape_cast %3 : vector<8x128xf32> to vector<1x8x128xf32>
    tpu.vector_store %arg5[%c0_4, %c0_5, %c0_6], %6 {strides = array<i32>} : memref<1x8x128xf32, #tpu.memory_space<vmem>>, vector<1x8x128xf32>,
    %7 = arith.subf %2, %3 : vector<8x128xf32>
    %c0_7 = arith.constant 0 : index
    %c0_8 = arith.constant 0 : index
    %c0_9 = arith.constant 0 : index
    %8 = vector.load %arg4[%c0_7, %c0_8, %c0_9] : memref<1x8x128xf32, #tpu.memory_space<vmem>>, vector<1x8x128xf32>
    %9 = vector.shape_cast %8 : vector<1x8x128xf32> to vector<8x128xf32>
    %10 = vector.shape_cast %7 : vector<8x128xf32> to vector<1x8x128xf32>
    tpu.vector_store %arg4[%c0_7, %c0_8, %c0_9], %10 {strides = array<i32>} : memref<1x8x128xf32, #tpu.memory_space<vmem>>, vector<1x8x128xf32>,
    return
  }
  func.func @transform_0(%arg0: i32, %arg1: i32) -> (i32, i32) {
    %c0_i32 = arith.constant 0 : i32
    %c0_i32_0 = arith.constant 0 : i32
    %c0_i32_1 = arith.constant 0 : i32
    return %c0_i32, %c0_i32_0 : i32, i32
  }
  func.func @transform_1(%arg0: i32, %arg1: i32) -> (i32, i32, i32) {
    %c0_i32 = arith.constant 0 : i32
    %c0_i32_0 = arith.constant 0 : i32
    return %arg0, %c0_i32, %arg1 : i32, i32, i32
  }
  func.func @transform_2(%arg0: i32, %arg1: i32) -> (i32, i32, i32) {
    %c0_i32 = arith.constant 0 : i32
    %c0_i32_0 = arith.constant 0 : i32
    return %arg0, %c0_i32, %arg1 : i32, i32, i32
  }
  func.func @transform_3(%arg0: i32, %arg1: i32) -> (i32, i32, i32) {
    %c0_i32 = arith.constant 0 : i32
    %c0_i32_0 = arith.constant 0 : i32
    return %arg0, %c0_i32, %arg1 : i32, i32, i32
  }
}

</mosaic_0001>

<llo_original>
// kernel: tpu_custom_call.1
$region0: #{tpu_custom_call.1}
  #allocation0 [shape = 'u32[]', space=smem, size = 0x4, offset = 0x4, fixed_abs, tag = 'smem constant byte address 0x4 - core index']
  #allocation1 [shape = 'u32[144,128]{1,0:T(1,128)}', space=vmem, size = 0x12000, scoped, tag = 'internal scratch']
  %s0 = inlined_call_operand.hbm [shape: f32[8,8], index: 0, kind: input, shape index: {}]
  %s1 = inlined_call_operand.hbm [shape: f32[2,8,128], index: 1, kind: input, shape index: {}]
  %s2 = inlined_call_operand.hbm [shape: f32[2,8,128], index: 2, kind: output, shape index: {0}]
  %s3 = inlined_call_operand.hbm [shape: f32[2,8,128], index: 3, kind: output, shape index: {1}]
  %4 = xla_tuple %s2, %s3
  %s5 = sld [smem:[#allocation0]]
  $region57: #{tpu_custom_call.1} parent=0
    _
  %s7 = ssub.s32 1, %s5
  %s8 = scalar_select 0, %s7, %s5
  $region1: #{tpu_custom_call.1} parent=0
    #allocation2 [shape = 'u8[4096]{0}', space=vmem, size = 0x1000, scoped, tag = 'input window, operand 0, single buffered']
    #allocation3 [shape = 's32[2]{0}', space=sflag, size = 0x8, scoped, tag = 'scoped memory for tpu_custom_call.1']
    #allocation4 [shape = 's32[2]{0}', space=sflag, size = 0x8, scoped, tag = 'scoped memory for tpu_custom_call.1']
    #allocation5 [shape = 'u8[8192]{0}', space=vmem, size = 0x2000, scoped, tag = 'input window, operand 1']
    #allocation6 [shape = 's32[2]{0}', space=sflag, size = 0x8, scoped, tag = 'scoped memory for tpu_custom_call.1']
    #allocation7 [shape = 'u8[8192]{0}', space=vmem, size = 0x2000, scoped, tag = 'output window, operand 0']
    #allocation8 [shape = 'u8[8192]{0}', space=vmem, size = 0x2000, scoped, tag = 'output window, operand 1']
    #allocation9 [shape = 's32[2]{0}', space=sflag, size = 0x8, scoped, tag = 'scoped memory for tpu_custom_call.1']
    %9 = vsyncpa [#allocation3], 0
    %10 = vsyncpa [#allocation6], 0
    %s11 = scalar_lea.sflag [#allocation6], 1
    %12 = vsyncpa %s11, 0
    %13 = vsyncpa [#allocation4], 0
    %s14 = scalar_lea.sflag [#allocation4], 1
    %15 = vsyncpa %s14, 0
    %16 = vsyncpa [#allocation9], 0
    %s17 = scalar_lea.sflag [#allocation9], 1
    %18 = vsyncpa %s17, 0
    loop: start=0, step=1, limit=4
    $region2: #{tpu_custom_call.1} parent=1 // loop_pre_header
      _
    $region3: #{tpu_custom_call.1} parent=1 // loop_header
      %s20 = sphi 0, %s24
      %p21 = scmp.ge.s32.totalorder %s20, 4
      %s27 = sphi 0, %s39
      %s28 = sphi 0, %s35
      %s29 = sphi 0, %s27
      %s30 = sphi 0, %s28
      %s31 = sphi 0, %s29
      %s32 = sphi 0, %s30
      %s40 = sphi 0, %s40
      %s42 = sphi 0, %s40
      %s43 = sphi 0, %s42
      %s57 = sphi 0, %s43
      %s65 = sphi 0, %s67
      %s68 = sphi 0, %s65
      %s69 = sphi 0, %s68
      %s85 = sphi 0, %s69
      %s93 = sphi 0, %s95
      %s96 = sphi 0, %s93
      %s97 = sphi 0, %s96
      %s113 = sphi 0, %s97
      %s121 = sphi 0, %s123
      %s124 = sphi 0, %s121
      %s125 = sphi 0, %s124
      %s141 = sphi 0, %s125
    $region4: #{tpu_custom_call.1} parent=1 // loop_header_branch
      %23 = sbr.rel (%p21) target = $region8
    $region5: #{tpu_custom_call.1} parent=1 // loop_body
      %s25 = ssub.s32 %s20, 1
      %s26 = ssub.s32 %s20, 2
      %s33 = sadd.s32 1, %s28
      %p34 = scmp.ge.s32.totalorder %s33, 1
      %s35 = scalar_select %p34, 0, %s33
      %s36 = sadd.s32 1, %s27
      %s37 = scalar_select %p34, %s36, %s27
      %p38 = scmp.ge.s32.totalorder %s37, 2
      %s39 = scalar_select %p38, 0, %s37
      %s41 = sadd.s32 %s40, 1
      %p44 = scmp.eq.s32.totalorder %s20, 1
      %p45 = scmp.ne.s32.totalorder %s40, %s42
      %p46 = scmp.eq.s32.totalorder %s20, 0
      %p47 = por %p45, %p46
      %p48 = scmp.ne.s32.totalorder %s40, %s42
      %p49 = scmp.eq.s32.totalorder %s25, 1
      %p50 = por %p48, %p49
      %p51 = scmp.ne.s32.totalorder %s42, %s43
      %p52 = scmp.eq.s32.totalorder %s25, 0
      %p53 = por %p51, %p52
      %p54 = scmp.ne.s32.totalorder %s42, %s43
      %p55 = scmp.eq.s32.totalorder %s26, 1
      %p56 = por %p54, %p55
      %p58 = scmp.ne.s32.totalorder %s43, %s57
      %p59 = scmp.eq.s32.totalorder %s26, 0
      %p60 = por %p58, %p59
      %s61 = ssub.s32 %s27, %s39
      %s62 = ssub.s32 %s28, %s35
      %s63 = sor.u32 %s61, %s62
      %p64 = scmp.eq.s32.totalorder %s63, 0
      %s66 = sadd.s32 %s65, 1
      %s67 = scalar_select %p64, %s65, %s66
      %p70 = pneg %p64
      %p71 = scmp.eq.s32.totalorder %s20, 1
      %p72 = por %p70, %p71
      %p73 = scmp.ne.s32.totalorder %s65, %s68
      %p74 = scmp.eq.s32.totalorder %s20, 0
      %p75 = por %p73, %p74
      %p76 = scmp.ne.s32.totalorder %s65, %s68
      %p77 = scmp.eq.s32.totalorder %s25, 1
      %p78 = por %p76, %p77
      %p79 = scmp.ne.s32.totalorder %s68, %s69
      %p80 = scmp.eq.s32.totalorder %s25, 0
      %p81 = por %p79, %p80
      %p82 = scmp.ne.s32.totalorder %s68, %s69
      %p83 = scmp.eq.s32.totalorder %s26, 1
      %p84 = por %p82, %p83
      %p86 = scmp.ne.s32.totalorder %s69, %s85
      %p87 = scmp.eq.s32.totalorder %s26, 0
      %p88 = por %p86, %p87
      %s89 = ssub.s32 %s27, %s39
      %s90 = ssub.s32 %s28, %s35
      %s91 = sor.u32 %s89, %s90
      %p92 = scmp.eq.s32.totalorder %s91, 0
      %s94 = sadd.s32 %s93, 1
      %s95 = scalar_select %p92, %s93, %s94
      %p98 = pneg %p92
      %p99 = scmp.eq.s32.totalorder %s20, 1
      %p100 = por %p98, %p99
      %p101 = scmp.ne.s32.totalorder %s93, %s96
      %p102 = scmp.eq.s32.totalorder %s20, 0
      %p103 = por %p101, %p102
      %p104 = scmp.ne.s32.totalorder %s93, %s96
      %p105 = scmp.eq.s32.totalorder %s25, 1
      %p106 = por %p104, %p105
      %p107 = scmp.ne.s32.totalorder %s96, %s97
      %p108 = scmp.eq.s32.totalorder %s25, 0
      %p109 = por %p107, %p108
      %p110 = scmp.ne.s32.totalorder %s96, %s97
      %p111 = scmp.eq.s32.totalorder %s26, 1
      %p112 = por %p110, %p111
      %p114 = scmp.ne.s32.totalorder %s97, %s113
      %p115 = scmp.eq.s32.totalorder %s26, 0
      %p116 = por %p114, %p115
      %s117 = ssub.s32 %s27, %s39
      %s118 = ssub.s32 %s28, %s35
      %s119 = sor.u32 %s117, %s118
      %p120 = scmp.eq.s32.totalorder %s119, 0
      %s122 = sadd.s32 %s121, 1
      %s123 = scalar_select %p120, %s121, %s122
      %p126 = pneg %p120
      %p127 = scmp.eq.s32.totalorder %s20, 1
      %p128 = por %p126, %p127
      %p129 = scmp.ne.s32.totalorder %s121, %s124
      %p130 = scmp.eq.s32.totalorder %s20, 0
      %p131 = por %p129, %p130
      %p132 = scmp.ne.s32.totalorder %s121, %s124
      %p133 = scmp.eq.s32.totalorder %s25, 1
      %p134 = por %p132, %p133
      %p135 = scmp.ne.s32.totalorder %s124, %s125
      %p136 = scmp.eq.s32.totalorder %s25, 0
      %p137 = por %p135, %p136
      %p138 = scmp.ne.s32.totalorder %s124, %s125
      %p139 = scmp.eq.s32.totalorder %s26, 1
      %p140 = por %p138, %p139
      %p142 = scmp.ne.s32.totalorder %s125, %s141
      %p143 = scmp.eq.s32.totalorder %s26, 0
      %p144 = por %p142, %p143
      %p145 = scmp.le.s32.totalorder 1, %s20
      %p146 = scmp.lt.s32.totalorder %s20, 3
      %p147 = pnand %p145, %p146
      %p148 = pneg %p147
      // Predicated region
      $region9: #{tpu_custom_call.1} parent=5 // pred_check
        _
      $region10: #{tpu_custom_call.1} parent=5 // pred_check_branch
        %150 = sbr.rel (%p147) target = $region12
      $region11: #{tpu_custom_call.1} parent=5 // pred_region
        %s151 = ssub.s32 %s20, 1
        // Predicated region
        $region13: #{tpu_custom_call.1} parent=11 // pred_check
          %p152 = pneg %p53
        $region14: #{tpu_custom_call.1} parent=11 // pred_check_branch
          %154 = sbr.rel (%p152) target = $region16
        $region15: #{tpu_custom_call.1} parent=11 // pred_region
          %s156 = ssub.s32 128, 128
          %157 = vsyncadd [#allocation3], %s156
          %s159 = sshll.u32 [#allocation2], 4
          %s160 = int_to_ptr.vmem [resolvable:$true] %s159
          %162 = dma.hbm_to_vmem [thread:$0]  %s0, 128, %s160, [#allocation3]
        $region16: #{tpu_custom_call.1} parent=11 // pred_fallthru
          _
      $region12: #{tpu_custom_call.1} parent=5 // pred_fallthru
        _
      %p163 = scmp.lt.s32.totalorder %s20, 2
      // Predicated region
      $region17: #{tpu_custom_call.1} parent=5 // pred_check
        %p164 = pneg %p163
      $region18: #{tpu_custom_call.1} parent=5 // pred_check_branch
        %166 = sbr.rel (%p164) target = $region20
      $region19: #{tpu_custom_call.1} parent=5 // pred_region
        // Predicated region
        $region21: #{tpu_custom_call.1} parent=19 // pred_check
          %p167 = pneg %p75
        $region22: #{tpu_custom_call.1} parent=19 // pred_check_branch
          %169 = sbr.rel (%p167) target = $region24
        $region23: #{tpu_custom_call.1} parent=19 // pred_region
          %s170 = sand.u32 %s65, 1
          %s171 = scalar_lea.sflag [#allocation6], %s170
          %s172 = sand.u32 %s65, 1
          %s173 = smul.addr %s172, 8
          %s174 = scalar_lea.vmem [#allocation5], %s173
          %s176 = ssub.s32 128, 128
          %177 = vsyncadd %s171, %s176
          %s178 = sadd.s32 %s28, %s27
          %s179 = smul.addr %s178, 128
          %s180 = scalar_lea.hbm %s1, %s179
          %s182 = sshll.u32 %s174, 4
          %s183 = int_to_ptr.vmem [resolvable:$true] %s182
          %185 = dma.hbm_to_vmem [thread:$0]  %s180, 128, %s183, %s171
        $region24: #{tpu_custom_call.1} parent=19 // pred_fallthru
          _
      $region20: #{tpu_custom_call.1} parent=5 // pred_fallthru
        _
      %p186 = scmp.le.s32.totalorder 1, %s20
      %p187 = scmp.lt.s32.totalorder %s20, 3
      %p188 = pnand %p186, %p187
      %p189 = pneg %p188
      // Predicated region
      $region25: #{tpu_custom_call.1} parent=5 // pred_check
        _
      $region26: #{tpu_custom_call.1} parent=5 // pred_check_branch
        %191 = sbr.rel (%p188) target = $region28
      $region27: #{tpu_custom_call.1} parent=5 // pred_region
        %s192 = ssub.s32 %s20, 1
        // Predicated region
        $region29: #{tpu_custom_call.1} parent=27 // pred_check
          %p193 = pneg %p53
        $region30: #{tpu_custom_call.1} parent=27 // pred_check_branch
          %195 = sbr.rel (%p193) target = $region32
        $region31: #{tpu_custom_call.1} parent=27 // pred_region
          %196 = dma.done [#allocation3], 128
        $region32: #{tpu_custom_call.1} parent=27 // pred_fallthru
          _
        %s197 = sand.u32 %s68, 1
        %s198 = scalar_lea.sflag [#allocation6], %s197
        %s199 = sand.u32 %s68, 1
        %s200 = smul.addr %s199, 8
        %s201 = scalar_lea.vmem [#allocation5], %s200
        // Predicated region
        $region33: #{tpu_custom_call.1} parent=27 // pred_check
          %p202 = pneg %p81
        $region34: #{tpu_custom_call.1} parent=27 // pred_check_branch
          %204 = sbr.rel (%p202) target = $region36
        $region35: #{tpu_custom_call.1} parent=27 // pred_region
          %205 = dma.done %s198, 128
        $region36: #{tpu_custom_call.1} parent=27 // pred_fallthru
          _
        %p206 = pneg %p53
        %p207 = pneg %p50
        %s208 = sand.u32 %s68, 1
        %s209 = scalar_lea.sflag [#allocation6], %s208
        %s210 = sand.u32 %s68, 1
        %s211 = smul.addr %s210, 8
        %s212 = scalar_lea.vmem [#allocation5], %s211
        %p213 = pneg %p81
        %p214 = pneg %p78
        %p215 = pneg %p109
        %p216 = pneg %p106
        %s217 = sand.u32 %s96, 1
        %s218 = scalar_lea.sflag [#allocation4], %s217
        %s219 = sand.u32 %s96, 1
        %s220 = smul.addr %s219, 8
        %s221 = scalar_lea.vmem [#allocation7], %s220
        %p222 = pneg %p137
        %p223 = pneg %p134
        %s224 = sand.u32 %s124, 1
        %s225 = scalar_lea.sflag [#allocation9], %s224
        %s226 = sand.u32 %s124, 1
        %s227 = smul.addr %s226, 8
        %s228 = scalar_lea.vmem [#allocation8], %s227
        %v229 = vld [vmem:[#allocation2] sm:$0xff]
        %v230 = vld [vmem:[%s201] sm:$0xff]
        %vm231 = vcmask 64512
        %v233 = vsel %vm231, %v229, 0
        %235 = vmatprep.subr.mxu0 0.0
        %236 = vmatpush1.msra.mxu0 %v230
        %237 = vmatprep.subr.mxu0 0.0
        %238 = vmatpush1.msra.mxu0 0.0
        %239 = vmatprep.subr.mxu0 0.0
        %240 = vmatpush1.msra.mxu0 0.0
        %241 = vmatprep.subr.mxu0 0.0
        %242 = vmatpush1.msra.mxu0 0.0
        %243 = vmatprep.subr.mxu0 0.0
        %244 = vmatpush1.msra.mxu0 0.0
        %245 = vmatprep.subr.mxu0 0.0
        %246 = vmatpush1.msra.mxu0 0.0
        %247 = vmatprep.subr.mxu0 0.0
        %248 = vmatpush1.msra.mxu0 0.0
        %249 = vmatprep.subr.mxu0 0.0
        %250 = vmatpush1.msra.mxu0 0.0
        %251 = vmatprep.subr.mxu0 0.0
        %252 = vmatpush1.msra.mxu0 0.0
        %253 = vmatprep.subr.mxu0 0.0
        %254 = vmatpush1.msra.mxu0 0.0
        %255 = vmatprep.subr.mxu0 0.0
        %256 = vmatpush1.msra.mxu0 0.0
        %257 = vmatprep.subr.mxu0 0.0
        %258 = vmatpush1.msra.mxu0 0.0
        %259 = vmatprep.subr.mxu0 0.0
        %260 = vmatpush1.msra.mxu0 0.0
        %261 = vmatprep.subr.mxu0 0.0
        %262 = vmatpush1.msra.mxu0 0.0
        %263 = vmatprep.subr.mxu0 0.0
        %264 = vmatpush1.msra.mxu0 0.0
        %265 = vmatprep.subr.mxu0 0.0
        %266 = vmatpush1.msra.mxu0 0.0
        %267 = vmatprep.subr.mxu0 0.0
        %268 = vmatpush1.msra.mxu0 0.0
        %269 = vmatprep.subr.mxu0 0.0
        %270 = vmatpush1.msra.mxu0 0.0
        %271 = vmatprep.subr.mxu0 0.0
        %272 = vmatpush1.msra.mxu0 0.0
        %273 = vmatprep.subr.mxu0 0.0
        %274 = vmatpush1.msra.mxu0 0.0
        %275 = vmatprep.subr.mxu0 0.0
        %276 = vmatpush1.msra.mxu0 0.0
        %277 = vmatprep.subr.mxu0 0.0
        %278 = vmatpush1.msra.mxu0 0.0
        %279 = vmatprep.subr.mxu0 0.0
        %280 = vmatpush1.msra.mxu0 0.0
        %281 = vmatprep.subr.mxu0 0.0
        %282 = vmatpush1.msra.mxu0 0.0
        %283 = vmatprep.subr.mxu0 0.0
        %284 = vmatpush1.msra.mxu0 0.0
        %285 = vmatprep.subr.mxu0 0.0
        %286 = vmatpush1.msra.mxu0 0.0
        %287 = vmatprep.subr.mxu0 0.0
        %288 = vmatpush1.msra.mxu0 0.0
        %289 = vmatprep.subr.mxu0 0.0
        %290 = vmatpush1.msra.mxu0 0.0
        %291 = vmatprep.subr.mxu0 0.0
        %292 = vmatpush1.msra.mxu0 0.0
        %293 = vmatprep.subr.mxu0 0.0
        %294 = vmatpush1.msra.mxu0 0.0
        %295 = vmatprep.subr.mxu0 0.0
        %296 = vmatpush1.msra.mxu0 0.0
        %297 = vmatprep.subr.mxu0 0.0
        %298 = vmatpush1.msra.mxu0 0.0
        %299 = vmatprep.mubr.f32.mxu0 0.0
        %300 = vmatmul.mubr.f32.gmra.mrb[0].mxu0 %v233
        %v301 = vpop.f32.mrb[0].mxu0
        %v302 = vadd.f32 0.0, %v301
        %v303 = vpop.f32.mrb[0].mxu0
        %304 = vdwg.mxu0
        %305 = vst [vmem:[%s228] sm:$0xff] %v302
        %v306 = vsub.f32 %v230, %v302
        %307 = vst [vmem:[%s221] sm:$0xff] %v306
        %s308 = sand.u32 %s96, 1
        %s309 = scalar_lea.sflag [#allocation4], %s308
        %s310 = sand.u32 %s96, 1
        %s311 = smul.addr %s310, 8
        %s312 = scalar_lea.vmem [#allocation7], %s311
        %s313 = sand.u32 %s124, 1
        %s314 = scalar_lea.sflag [#allocation9], %s313
        %s315 = sand.u32 %s124, 1
        %s316 = smul.addr %s315, 8
        %s317 = scalar_lea.vmem [#allocation8], %s316
        // Predicated region
        $region37: #{tpu_custom_call.1} parent=27 // pred_check
          %p318 = pneg %p106
        $region38: #{tpu_custom_call.1} parent=27 // pred_check_branch
          %320 = sbr.rel (%p318) target = $region40
        $region39: #{tpu_custom_call.1} parent=27 // pred_region
          %s322 = ssub.s32 128, 128
          %323 = vsyncadd %s309, %s322
          %s324 = sadd.s32 %s30, %s29
          %s325 = smul.addr %s324, 128
          %s326 = scalar_lea.hbm %s2, %s325
          %s328 = sshll.u32 %s312, 4
          %s329 = int_to_ptr.vmem [resolvable:$true] %s328
          %331 = dma.vmem_to_hbm [thread:$0]  %s329, 128, %s326, %s309
        $region40: #{tpu_custom_call.1} parent=27 // pred_fallthru
          _
        // Predicated region
        $region41: #{tpu_custom_call.1} parent=27 // pred_check
          %p332 = pneg %p134
        $region42: #{tpu_custom_call.1} parent=27 // pred_check_branch
          %334 = sbr.rel (%p332) target = $region44
        $region43: #{tpu_custom_call.1} parent=27 // pred_region
          %s336 = ssub.s32 128, 128
          %337 = vsyncadd %s314, %s336
          %s338 = sadd.s32 %s30, %s29
          %s339 = smul.addr %s338, 128
          %s340 = scalar_lea.hbm %s3, %s339
          %s342 = sshll.u32 %s317, 4
          %s343 = int_to_ptr.vmem [resolvable:$true] %s342
          %345 = dma.vmem_to_hbm [thread:$0]  %s343, 128, %s340, %s314
        $region44: #{tpu_custom_call.1} parent=27 // pred_fallthru
          _
      $region28: #{tpu_custom_call.1} parent=5 // pred_fallthru
        _
      %p346 = scmp.le.s32.totalorder 2, %s20
      // Predicated region
      $region45: #{tpu_custom_call.1} parent=5 // pred_check
        %p347 = pneg %p346
      $region46: #{tpu_custom_call.1} parent=5 // pred_check_branch
        %349 = sbr.rel (%p347) target = $region48
      $region47: #{tpu_custom_call.1} parent=5 // pred_region
        %s350 = ssub.s32 %s20, 2
        // Predicated region
        $region49: #{tpu_custom_call.1} parent=47 // pred_check
          %p351 = pneg %p112
        $region50: #{tpu_custom_call.1} parent=47 // pred_check_branch
          %353 = sbr.rel (%p351) target = $region52
        $region51: #{tpu_custom_call.1} parent=47 // pred_region
          %s354 = sand.u32 %s97, 1
          %s355 = scalar_lea.sflag [#allocation4], %s354
          %s356 = sand.u32 %s97, 1
          %s357 = smul.addr %s356, 8
          %s358 = scalar_lea.vmem [#allocation7], %s357
          %359 = dma.done %s355, 128
        $region52: #{tpu_custom_call.1} parent=47 // pred_fallthru
          _
        // Predicated region
        $region53: #{tpu_custom_call.1} parent=47 // pred_check
          %p360 = pneg %p140
        $region54: #{tpu_custom_call.1} parent=47 // pred_check_branch
          %362 = sbr.rel (%p360) target = $region56
        $region55: #{tpu_custom_call.1} parent=47 // pred_region
          %s363 = sand.u32 %s125, 1
          %s364 = scalar_lea.sflag [#allocation9], %s363
          %s365 = sand.u32 %s125, 1
          %s366 = smul.addr %s365, 8
          %s367 = scalar_lea.vmem [#allocation8], %s366
          %368 = dma.done %s364, 128
        $region56: #{tpu_custom_call.1} parent=47 // pred_fallthru
          _
      $region48: #{tpu_custom_call.1} parent=5 // pred_fallthru
        _
    $region6: #{tpu_custom_call.1} parent=1 // loop_footer
      %s24 = sadd.s32 1, %s20
    $region7: #{tpu_custom_call.1} parent=1 // loop_footer_branch
      %19 = sbr.rel target = $region3
    $region8: #{tpu_custom_call.1} parent=1 // loop_exit
      _
    %369 = vsyncpa [#allocation3], 1
    %s370 = scalar_lea.sflag [#allocation3], 1
    %371 = vsyncpa %s370, 1
    %372 = vsyncpa [#allocation6], 1
    %s373 = scalar_lea.sflag [#allocation6], 1
    %374 = vsyncpa %s373, 1
    %375 = vsyncpa [#allocation4], 1
    %s376 = scalar_lea.sflag [#allocation4], 1
    %377 = vsyncpa %s376, 1
    %378 = vsyncpa [#allocation9], 1
    %s379 = scalar_lea.sflag [#allocation9], 1
    %380 = vsyncpa %s379, 1

</llo_original>
